<compile_context>
chip_gen: v5e
topology: v5e:2x2
jax: 0.10.0
libtpu: 0.0.40
codegen_flags: <defaults>
</compile_context>

<pallas_src>
import functools

import jax
import jax.numpy as jnp
from jax.experimental import pallas as pl
from jax.experimental.pallas import tpu as pltpu


def _acp_kernel(x_ref, o_ref, *, inv_count):
    # x_ref: (TN, G, BIN) ; o_ref: (TN, 2, G)
    xf = x_ref[...].astype(jnp.float32)                       # f32 accumulation
    o_ref[:, 0, :] = jnp.max(xf, axis=-1).astype(o_ref.dtype)             # max pool
    o_ref[:, 1, :] = (jnp.sum(xf, axis=-1) * inv_count).astype(o_ref.dtype)  # avg pool


def _largest_divisor_leq(n, cap):
    cap = max(1, min(n, cap))
    for t in range(cap, 0, -1):
        if n % t == 0:
            return t
    return n


def adaptive_concat_pool2d(x, sz=None):
    """Pallas implementation of AdaptiveConcatPool2d.forward.

    x:  (N, C, H, W)
    returns: (N, 2*C, out_size, out_size) with max-pool channels first,
             avg-pool channels second (matching torch.cat([mp, ap], 1)).
    """
    out_size = sz or 1
    n, c, h, w = x.shape
    # TODO(synk): adaptive pooling with H or W not divisible by out_size needs
    # uneven/overlapping bins; only the evenly-divisible case is implemented.
    assert h % out_size == 0 and w % out_size == 0

    bh, bw = h // out_size, w // out_size
    g = c * out_size * out_size          # one row per (channel, bin) pair
    bin_count = bh * bw

    # (N,C,H,W) -> (N,C,sz,bh,sz,bw) -> (N,C,sz,sz,bh,bw) -> (N, G, BIN)
    xr = x.reshape(n, c, out_size, bh, out_size, bw)
    xr = jnp.transpose(xr, (0, 1, 2, 4, 3, 5)).reshape(n, g, bin_count)

    # Tile the batch axis: largest divisor of N that keeps the double-buffered
    # input tile under a conservative VMEM budget (~8 MiB for x tiles).
    itemsize = jnp.dtype(x.dtype).itemsize
    bytes_per_row = max(1, g * bin_count * itemsize)
    vmem_row_cap = max(1, (8 * 1024 * 1024) // (2 * bytes_per_row))
    tn = _largest_divisor_leq(n, min(vmem_row_cap, 1024))
    grid = (n // tn,)

    kernel = functools.partial(_acp_kernel, inv_count=1.0 / float(bin_count))

    out = pl.pallas_call(
        kernel,
        out_shape=jax.ShapeDtypeStruct((n, 2, g), x.dtype),
        grid=grid,
        in_specs=[
            pl.BlockSpec((tn, g, bin_count), lambda i: (i, 0, 0)),
        ],
        out_specs=pl.BlockSpec((tn, 2, g), lambda i: (i, 0, 0)),
        compiler_params=pltpu.CompilerParams(
            dimension_semantics=("parallel",),   # batch tiles are independent
        ),
    )(xr)

    # (N, 2, C, sz, sz) -> (N, 2C, sz, sz); channels 0..C-1 = max, C..2C-1 = avg
    return out.reshape(n, 2, c, out_size, out_size).reshape(
        n, 2 * c, out_size, out_size
    )


def _reference(x, sz=None):
    out_size = sz or 1
    n, c, h, w = x.shape
    bh, bw = h // out_size, w // out_size
    xr = x.reshape(n, c, out_size, bh, out_size, bw)
    mx = jnp.max(xr, axis=(3, 5))
    av = jnp.mean(xr, axis=(3, 5))
    return jnp.concatenate([mx, av], axis=1)


if __name__ == "__main__":
    key = jax.random.PRNGKey(0)
    batch, channels, spatial = 2, 4, 16
    x = jax.random.normal(key, (batch, channels, spatial, spatial), dtype=jnp.float32)

    # Default output size (sz=None -> 1), as in the module's default config.
    out = adaptive_concat_pool2d(x)
    out = jax.block_until_ready(out)
    ref = _reference(x)
    assert out.shape == (batch, 2 * channels, 1, 1)
    assert jnp.allclose(out, ref, atol=1e-5, rtol=1e-5)

    # Also exercise an explicit output size (sz=2, evenly divides 16).
    out2 = adaptive_concat_pool2d(x, sz=2)
    out2 = jax.block_until_ready(out2)
    ref2 = _reference(x, sz=2)
    assert out2.shape == (batch, 2 * channels, 2, 2)
    assert jnp.allclose(out2, ref2, atol=1e-5, rtol=1e-5)

    print("KERNEL_OK")
</pallas_src>

<mosaic_0001>
module attributes {stable_mosaic.version = 11 : i64} {
  func.func @_acp_kernel(%arg0: i32, %arg1: memref<2x4x256xf32, #tpu.memory_space<vmem>>, %arg2: memref<2x2x4xf32, #tpu.memory_space<vmem>>) attributes {dimension_semantics = [#tpu.dimension_semantics<parallel>], iteration_bounds = array<i64: 1>, scalar_prefetch = 0 : i64, scratch_operands = 0 : i64, tpu.core_type = #tpu.core_type<tc>, window_params = [{transform_indices = @transform_0, window_bounds = array<i64: 2, 4, 256>}, {transform_indices = @transform_1, window_bounds = array<i64: 2, 2, 4>}]} {
    %c0 = arith.constant 0 : index
    %c0_0 = arith.constant 0 : index
    %c0_1 = arith.constant 0 : index
    %0 = vector.load %arg1[%c0, %c0_0, %c0_1] : memref<2x4x256xf32, #tpu.memory_space<vmem>>, vector<2x4x256xf32>
    %cst = arith.constant dense<0xFF800000> : vector<2x4xf32>
    %1 = vector.multi_reduction <maximumf>, %0, %cst [2] : vector<2x4x256xf32> to vector<2x4xf32>
    %c0_2 = arith.constant 0 : index
    %c0_3 = arith.constant 0 : index
    %c0_4 = arith.constant 0 : index
    %2 = vector.load %arg2[%c0_2, %c0_3, %c0_4] : memref<2x2x4xf32, #tpu.memory_space<vmem>>, vector<2x1x4xf32>
    %3 = vector.shape_cast %2 : vector<2x1x4xf32> to vector<2x4xf32>
    %4 = vector.shape_cast %1 : vector<2x4xf32> to vector<2x1x4xf32>
    tpu.vector_store %arg2[%c0_2, %c0_3, %c0_4], %4 {strides = array<i32>} : memref<2x2x4xf32, #tpu.memory_space<vmem>>, vector<2x1x4xf32>,
    %cst_5 = arith.constant dense<0.000000e+00> : vector<2x4xf32>
    %5 = vector.multi_reduction <add>, %0, %cst_5 [2] : vector<2x4x256xf32> to vector<2x4xf32>
    %cst_6 = arith.constant 3.906250e-03 : f32
    %6 = vector.broadcast %cst_6 : f32 to vector<2x4xf32>
    %7 = arith.mulf %5, %6 : vector<2x4xf32>
    %c0_7 = arith.constant 0 : index
    %c1 = arith.constant 1 : index
    %c0_8 = arith.constant 0 : index
    %8 = vector.load %arg2[%c0_7, %c1, %c0_8] : memref<2x2x4xf32, #tpu.memory_space<vmem>>, vector<2x1x4xf32>
    %9 = vector.shape_cast %8 : vector<2x1x4xf32> to vector<2x4xf32>
    %10 = vector.shape_cast %7 : vector<2x4xf32> to vector<2x1x4xf32>
    tpu.vector_store %arg2[%c0_7, %c1, %c0_8], %10 {strides = array<i32>} : memref<2x2x4xf32, #tpu.memory_space<vmem>>, vector<2x1x4xf32>,
    return
  }
  func.func @transform_0(%arg0: i32) -> (i32, i32, i32) {
    %c0_i32 = arith.constant 0 : i32
    %c0_i32_0 = arith.constant 0 : i32
    %c0_i32_1 = arith.constant 0 : i32
    return %arg0, %c0_i32, %c0_i32_0 : i32, i32, i32
  }
  func.func @transform_1(%arg0: i32) -> (i32, i32, i32) {
    %c0_i32 = arith.constant 0 : i32
    %c0_i32_0 = arith.constant 0 : i32
    %c0_i32_1 = arith.constant 0 : i32
    return %arg0, %c0_i32, %c0_i32_0 : i32, i32, i32
  }
}

</mosaic_0001>

<llo_original>
// kernel: tpu_custom_call.1
$region0: #{tpu_custom_call.1}
  #allocation0 [shape = 'u32[]', space=smem, size = 0x4, offset = 0x4, fixed_abs, tag = 'smem constant byte address 0x4 - core index']
  #allocation1 [shape = 'u32[72,128]{1,0:T(1,128)}', space=vmem, size = 0x9000, scoped, tag = 'internal scratch']
  %s0 = inlined_call_operand.hbm [shape: f32[2,4,256], index: 0, kind: input, shape index: {}]
  %s1 = inlined_call_operand.hbm [shape: f32[2,2,4], index: 1, kind: output, shape index: {}]
  %s2 = sld [smem:[#allocation0]]
  $region18: #{tpu_custom_call.1} parent=0
    _
  %s4 = ssub.s32 1, %s2
  %s5 = scalar_select 0, %s4, %s2
  $region1: #{tpu_custom_call.1} parent=0
    #allocation2 [shape = 'u8[8192]{0}', space=vmem, size = 0x2000, scoped, tag = 'input window, operand 0, single buffered']
    #allocation3 [shape = 's32[1]{0}', space=sflag, size = 0x4, scoped, tag = 'scoped memory for tpu_custom_call.1']
    #allocation4 [shape = 's32[1]{0}', space=sflag, size = 0x4, scoped, tag = 'scoped memory for tpu_custom_call.1']
    #allocation5 [shape = 'u8[2048]{0}', space=vmem, size = 0x800, scoped, tag = 'output window, operand 0, single buffered']
    %6 = vsyncpa [#allocation3], 0
    %7 = vsyncpa [#allocation4], 0
    // Predicated region
    $region2: #{tpu_custom_call.1} parent=1 // pred_check
      _
    $region3: #{tpu_custom_call.1} parent=1 // pred_check_branch
      %9 = sbr.rel (0) target = $region5
    $region4: #{tpu_custom_call.1} parent=1 // pred_region
      %11 = vsyncadd [#allocation3], 0
      %s12 = sshll.u32 %s0, 4
      %s13 = int_to_ptr.hbm [resolvable:$true] %s12
      %s14 = sshll.u32 [#allocation2], 4
      %s15 = int_to_ptr.vmem [resolvable:$true] %s14
      %20 = dma.hbm_to_vmem [thread:$0]  %s13, 256, %s15, [#allocation3], 128, 128, 8
    $region5: #{tpu_custom_call.1} parent=1 // pred_fallthru
      _
    // Predicated region
    $region6: #{tpu_custom_call.1} parent=1 // pred_check
      _
    $region7: #{tpu_custom_call.1} parent=1 // pred_check_branch
      %22 = sbr.rel (0) target = $region9
    $region8: #{tpu_custom_call.1} parent=1 // pred_region
      %24 = dma.done [#allocation3], 256
    $region9: #{tpu_custom_call.1} parent=1 // pred_fallthru
      _
    %v25 = vld [vmem:[#allocation2] sm:$0xff]
    %v26 = vld [vmem:[#allocation2 + $0x8] sm:$0xff]
    %29 = vst [vmem:[#allocation1] ss:$2 sm:$0xff] %v25
    %v30 = vld.sshfl [vmem:[#allocation1] sm:$0xff pattern:$0x75316420]
    %v31 = vld.sshfl [vmem:[#allocation1 + $0x8] sm:$0xff pattern:$0x75316420]
    %s32 = scalar_lea.vmem [#allocation1], 16
    %33 = vst [vmem:[%s32] ss:$2 sm:$0xff] %v26
    %v34 = vld.sshfl [vmem:[#allocation1 + $0x10] sm:$0xff pattern:$0x75316420]
    %v35 = vld.sshfl [vmem:[#allocation1 + $0x18] sm:$0xff pattern:$0x75316420]
    %vm40 = vcmask 1043456
    %v41 = vsel %vm40, %v30, -inf
    %v42 = vsel %vm40, %v31, -inf
    %v43 = vmax.f32 %v41, %v42
    %44 = vmax.xlane.f32.xlu0 %v43
    %v45 = vpop.xlane.xlu0 %44
    %v46 = vsel %vm40, %v34, -inf
    %v47 = vsel %vm40, %v35, -inf
    %v48 = vmax.f32 %v46, %v47
    %49 = vmax.xlane.f32.xlu0 %v48
    %v50 = vpop.xlane.xlu0 %49
    %v53 = vlaneseq
    %v54 = vand.u32 %v53, 127
    %v55 = vperm.slane %v45, %v54
    %v56 = vperm.slane %v50, %v54
    %vm59 = vcmask 24576
    %60 = vst.msk [vmem:[#allocation5] sm:$0x1] %vm59, %v55
    %61 = vst.msk [vmem:[#allocation5 + $0x2] sm:$0x1] %vm59, %v56
    %62 = vst [vmem:[#allocation1] ss:$2 sm:$0xff] %v25
    %v63 = vld.sshfl [vmem:[#allocation1] sm:$0xff pattern:$0x75316420]
    %v64 = vld.sshfl [vmem:[#allocation1 + $0x8] sm:$0xff pattern:$0x75316420]
    %s65 = scalar_lea.vmem [#allocation1], 16
    %66 = vst [vmem:[%s65] ss:$2 sm:$0xff] %v26
    %v67 = vld.sshfl [vmem:[#allocation1 + $0x10] sm:$0xff pattern:$0x75316420]
    %v68 = vld.sshfl [vmem:[#allocation1 + $0x18] sm:$0xff pattern:$0x75316420]
    %v73 = vsel %vm40, %v63, 0.0
    %v74 = vsel %vm40, %v64, 0.0
    %v75 = vadd.f32 %v73, %v74
    %76 = vadd.xlane.f32.xlu0 %v75
    %v77 = vpop.xlane.xlu0 %76
    %v78 = vsel %vm40, %v67, 0.0
    %v79 = vsel %vm40, %v68, 0.0
    %v80 = vadd.f32 %v78, %v79
    %81 = vadd.xlane.f32.xlu0 %v80
    %v82 = vpop.xlane.xlu0 %81
    %v83 = vmul.f32 %v77, 0.00390625
    %v84 = vmul.f32 %v82, 0.00390625
    %v87 = vperm.slane %v83, %v54
    %v88 = vperm.slane %v84, %v54
    %91 = vst.msk [vmem:[#allocation5 + $0x1] sm:$0x1] %vm59, %v87
    %92 = vst.msk [vmem:[#allocation5 + $0x3] sm:$0x1] %vm59, %v88
    // Predicated region
    $region10: #{tpu_custom_call.1} parent=1 // pred_check
      _
    $region11: #{tpu_custom_call.1} parent=1 // pred_check_branch
      %94 = sbr.rel (0) target = $region13
    $region12: #{tpu_custom_call.1} parent=1 // pred_region
      %96 = vsyncadd [#allocation4], 0
      %s97 = sshll.u32 [#allocation5], 4
      %s98 = int_to_ptr.vmem [resolvable:$true] %s97
      %s99 = sshll.u32 %s1, 4
      %s100 = int_to_ptr.hbm [resolvable:$true] %s99
      %105 = dma.vmem_to_hbm [thread:$0]  %s98, 64, %s100, [#allocation4], 32, 32, 2
    $region13: #{tpu_custom_call.1} parent=1 // pred_fallthru
      _
    // Predicated region
    $region14: #{tpu_custom_call.1} parent=1 // pred_check
      _
    $region15: #{tpu_custom_call.1} parent=1 // pred_check_branch
      %107 = sbr.rel (0) target = $region17
    $region16: #{tpu_custom_call.1} parent=1 // pred_region
      %109 = dma.done [#allocation4], 64
    $region17: #{tpu_custom_call.1} parent=1 // pred_fallthru
      _
    %110 = vsyncpa [#allocation3], 1
    %111 = vsyncpa [#allocation4], 1

</llo_original>
